<compile_context>
chip_gen: v5e
topology: v5e:2x2
jax: 0.10.0
libtpu: 0.0.40
codegen_flags: <defaults>
</compile_context>

<pallas_src>
import jax
import jax.numpy as jnp
from jax.experimental import pallas as pl
from jax.experimental.pallas import tpu as pltpu

N_OUT_PAD = 8      # fc3 rows padded to one sublane group (8)
MAX_TB = 2048      # keeps double-buffered tiles tiny even on v7x (64 MiB VMEM)


def _round_up(v, m):
    return ((v + m - 1) // m) * m


def qnet_kernel(x_ref, w1_ref, b1_ref, w2_ref, b2_ref, w3t_ref, b3t_ref, ot_ref):
    x = x_ref[...]                       # (TB, 4)   f32
    w1 = w1_ref[...]                     # (4, 128)  f32

    # fc1: K=4 contraction as rank-1 VPU updates (2-way tree; avoids a padded
    # MXU pass that would waste ~97% of the systolic array).
    p0 = x[:, 0:1] * w1[0:1, :] + x[:, 1:2] * w1[1:2, :]
    p1 = x[:, 2:3] * w1[2:3, :] + x[:, 3:4] * w1[3:4, :]
    h1 = jnp.maximum(b1_ref[...] + p0 + p1, 0.0)          # (TB, 128) f32

    # fc2: bf16 MXU matmul (native rate on v5e/v6e/v7x), f32 accumulation.
    h2 = jnp.dot(h1.astype(jnp.bfloat16), w2_ref[...],
                 preferred_element_type=jnp.float32)
    h2 = jnp.maximum(h2 + b2_ref[...], 0.0)               # (TB, 128) f32

    # fc3 in transposed orientation: (8, 128) . (TB, 128)^T -> (8, TB).
    # Batch lands on the lane axis, so the HBM store is fully lane-dense.
    h3t = jax.lax.dot_general(
        w3t_ref[...], h2.astype(jnp.bfloat16),
        dimension_numbers=(((1,), (1,)), ((), ())),
        preferred_element_type=jnp.float32)               # (8, TB) f32
    ot_ref[...] = (h3t + b3t_ref[...]).astype(ot_ref.dtype)


def prepare_params(raw):
    """One-time conversion of raw f32 params to kernel-ready params."""
    w1, b1, w2, b2, w3, b3 = raw
    n_out = w3.shape[1]
    # fc3: transpose to (out, in), pad out-dim to 8 sublanes, bf16 for the MXU.
    w3t = jnp.zeros((N_OUT_PAD, w3.shape[0]), jnp.float32).at[:n_out, :].set(w3.T)
    b3t = jnp.zeros((N_OUT_PAD, 1), jnp.float32).at[:n_out, :].set(b3.T)
    return (w1, b1,
            w2.astype(jnp.bfloat16), b2,
            w3t.astype(jnp.bfloat16), b3t,
            n_out)


def qnet_forward(x, kparams, *, tb=512):
    """x: (B, 4) f32 -> (B, n_out) f32 Q-values."""
    w1, b1, w2, b2, w3t, b3t, n_out = kparams
    B = x.shape[0]

    # Batch tile: multiple of 128 (lane-aligned transposed output block).
    # For B <= tb, aim for >= 2 grid steps so v7x's two TCs both get work.
    if B <= tb:
        TB = max(128, _round_up(pl.cdiv(B, 2), 128))
    else:
        TB = _round_up(tb, 128)
    TB = min(TB, MAX_TB)
    Bp = _round_up(B, TB)
    if Bp != B:
        x = jnp.pad(x, ((0, Bp - B), (0, 0)))

    # Weights/biases: full block, constant index_map -> resident in VMEM.
    const = lambda a: pl.BlockSpec(a.shape, lambda i: (0,) * a.ndim)

    out_t = pl.pallas_call(
        qnet_kernel,
        out_shape=jax.ShapeDtypeStruct((N_OUT_PAD, Bp), jnp.float32),
        grid=(Bp // TB,),
        in_specs=[
            pl.BlockSpec((TB, 4), lambda i: (i, 0)),   # x: streamed per tile
            const(w1), const(b1),
            const(w2), const(b2),
            const(w3t), const(b3t),
        ],
        out_specs=pl.BlockSpec((N_OUT_PAD, TB), lambda i: (0, i)),
        compiler_params=pltpu.CompilerParams(
            dimension_semantics=("parallel",)),        # megacore on v7x
    )(x, w1, b1, w2, b2, w3t, b3t)

    # (8, Bp) -> (B, n_out): tiny slice + transpose in the wrapper.
    return out_t[:n_out, :B].T


def init_raw_params(key):
    # Deterministic synthetic init (PyTorch-Linear-like uniform bounds).
    ks = jax.random.split(key, 6)

    def linear(kw, kb, fan_in, fan_out):
        bound = 1.0 / jnp.sqrt(float(fan_in))
        w = jax.random.uniform(kw, (fan_in, fan_out), jnp.float32, -bound, bound)
        b = jax.random.uniform(kb, (1, fan_out), jnp.float32, -bound, bound)
        return w, b

    w1, b1 = linear(ks[0], ks[1], 4, 128)
    w2, b2 = linear(ks[2], ks[3], 128, 128)
    w3, b3 = linear(ks[4], ks[5], 128, 2)
    return (w1, b1, w2, b2, w3, b3)


def _ref_forward(x, raw, mxu_dtype=jnp.float32):
    """Pure-JAX reference; mxu_dtype=bf16 mirrors the kernel's MXU operands."""
    w1, b1, w2, b2, w3, b3 = raw
    h1 = jnp.maximum(
        jnp.dot(x, w1, precision=jax.lax.Precision.HIGHEST) + b1, 0.0)
    h2 = jnp.maximum(
        jnp.dot(h1.astype(mxu_dtype), w2.astype(mxu_dtype),
                preferred_element_type=jnp.float32) + b2, 0.0)
    return jnp.dot(h2.astype(mxu_dtype), w3.astype(mxu_dtype),
                   preferred_element_type=jnp.float32) + b3


if __name__ == "__main__":
    key = jax.random.PRNGKey(0)
    kp, kx1, kx2 = jax.random.split(key, 3)
    raw = init_raw_params(kp)
    kparams = prepare_params(raw)

    # Small CartPole-style batch (obs dim = 4).
    B = 8
    x = jax.random.normal(kx1, (B, 4), dtype=jnp.float32)
    out = jax.block_until_ready(qnet_forward(x, kparams))
    assert out.shape == (B, 2)
    # Tight check vs. a reference that uses the same bf16 MXU operands ...
    assert jnp.allclose(out, _ref_forward(x, raw, jnp.bfloat16),
                        atol=1e-2, rtol=1e-2)
    # ... and a loose sanity check vs. the full-f32 reference (bf16 MXU).
    assert jnp.allclose(out, _ref_forward(x, raw), atol=1e-1, rtol=1e-1)

    # Larger / non-divisible batch: exercises grid>=2, padding and slicing
    # (TB=256, Bp=512, grid=2).
    B2 = 260
    x2 = jax.random.normal(kx2, (B2, 4), dtype=jnp.float32)
    out2 = jax.block_until_ready(qnet_forward(x2, kparams))
    assert out2.shape == (B2, 2)
    assert jnp.allclose(out2, _ref_forward(x2, raw, jnp.bfloat16),
                        atol=1e-2, rtol=1e-2)
    assert jnp.allclose(out2, _ref_forward(x2, raw), atol=1e-1, rtol=1e-1)

    print("KERNEL_OK")
</pallas_src>

<mosaic_0001>
module attributes {stable_mosaic.version = 11 : i64} {
  func.func @qnet_kernel(%arg0: i32, %arg1: memref<128x4xf32, #tpu.memory_space<vmem>>, %arg2: memref<4x128xf32, #tpu.memory_space<vmem>>, %arg3: memref<1x128xf32, #tpu.memory_space<vmem>>, %arg4: memref<128x128xbf16, #tpu.memory_space<vmem>>, %arg5: memref<1x128xf32, #tpu.memory_space<vmem>>, %arg6: memref<8x128xbf16, #tpu.memory_space<vmem>>, %arg7: memref<8x1xf32, #tpu.memory_space<vmem>>, %arg8: memref<8x128xf32, #tpu.memory_space<vmem>>) attributes {dimension_semantics = [#tpu.dimension_semantics<parallel>], iteration_bounds = array<i64: 1>, scalar_prefetch = 0 : i64, scratch_operands = 0 : i64, tpu.core_type = #tpu.core_type<tc>, window_params = [{transform_indices = @transform_0, window_bounds = array<i64: 128, 4>}, {pipeline_mode = #tpu.pipeline_mode<synchronous>, transform_indices = @transform_1, window_bounds = array<i64: 4, 128>}, {pipeline_mode = #tpu.pipeline_mode<synchronous>, transform_indices = @transform_2, window_bounds = array<i64: 1, 128>}, {pipeline_mode = #tpu.pipeline_mode<synchronous>, transform_indices = @transform_3, window_bounds = array<i64: 128, 128>}, {pipeline_mode = #tpu.pipeline_mode<synchronous>, transform_indices = @transform_4, window_bounds = array<i64: 1, 128>}, {pipeline_mode = #tpu.pipeline_mode<synchronous>, transform_indices = @transform_5, window_bounds = array<i64: 8, 128>}, {pipeline_mode = #tpu.pipeline_mode<synchronous>, transform_indices = @transform_6, window_bounds = array<i64: 8, 1>}, {transform_indices = @transform_7, window_bounds = array<i64: 8, 128>}]} {
    %c0 = arith.constant 0 : index
    %c0_0 = arith.constant 0 : index
    %0 = vector.load %arg1[%c0, %c0_0] : memref<128x4xf32, #tpu.memory_space<vmem>>, vector<128x4xf32>
    %c0_1 = arith.constant 0 : index
    %c0_2 = arith.constant 0 : index
    %1 = vector.load %arg2[%c0_1, %c0_2] : memref<4x128xf32, #tpu.memory_space<vmem>>, vector<4x128xf32>
    %2 = vector.extract_strided_slice %0 {offsets = [0, 0], sizes = [128, 1], strides = [1, 1]} : vector<128x4xf32> to vector<128x1xf32>
    %3 = vector.extract_strided_slice %1 {offsets = [0, 0], sizes = [1, 128], strides = [1, 1]} : vector<4x128xf32> to vector<1x128xf32>
    %4 = vector.broadcast %2 : vector<128x1xf32> to vector<128x128xf32>
    %5 = vector.broadcast %3 : vector<1x128xf32> to vector<128x128xf32>
    %6 = arith.mulf %4, %5 : vector<128x128xf32>
    %7 = vector.extract_strided_slice %0 {offsets = [0, 1], sizes = [128, 1], strides = [1, 1]} : vector<128x4xf32> to vector<128x1xf32>
    %8 = vector.extract_strided_slice %1 {offsets = [1, 0], sizes = [1, 128], strides = [1, 1]} : vector<4x128xf32> to vector<1x128xf32>
    %9 = vector.broadcast %7 : vector<128x1xf32> to vector<128x128xf32>
    %10 = vector.broadcast %8 : vector<1x128xf32> to vector<128x128xf32>
    %11 = arith.mulf %9, %10 : vector<128x128xf32>
    %12 = arith.addf %6, %11 : vector<128x128xf32>
    %13 = vector.extract_strided_slice %0 {offsets = [0, 2], sizes = [128, 1], strides = [1, 1]} : vector<128x4xf32> to vector<128x1xf32>
    %14 = vector.extract_strided_slice %1 {offsets = [2, 0], sizes = [1, 128], strides = [1, 1]} : vector<4x128xf32> to vector<1x128xf32>
    %15 = vector.broadcast %13 : vector<128x1xf32> to vector<128x128xf32>
    %16 = vector.broadcast %14 : vector<1x128xf32> to vector<128x128xf32>
    %17 = arith.mulf %15, %16 : vector<128x128xf32>
    %18 = vector.extract_strided_slice %0 {offsets = [0, 3], sizes = [128, 1], strides = [1, 1]} : vector<128x4xf32> to vector<128x1xf32>
    %19 = vector.extract_strided_slice %1 {offsets = [3, 0], sizes = [1, 128], strides = [1, 1]} : vector<4x128xf32> to vector<1x128xf32>
    %20 = vector.broadcast %18 : vector<128x1xf32> to vector<128x128xf32>
    %21 = vector.broadcast %19 : vector<1x128xf32> to vector<128x128xf32>
    %22 = arith.mulf %20, %21 : vector<128x128xf32>
    %23 = arith.addf %17, %22 : vector<128x128xf32>
    %c0_3 = arith.constant 0 : index
    %c0_4 = arith.constant 0 : index
    %24 = vector.load %arg3[%c0_3, %c0_4] : memref<1x128xf32, #tpu.memory_space<vmem>>, vector<1x128xf32>
    %25 = vector.broadcast %24 : vector<1x128xf32> to vector<128x128xf32>
    %26 = arith.addf %25, %12 : vector<128x128xf32>
    %27 = arith.addf %26, %23 : vector<128x128xf32>
    %cst = arith.constant 0.000000e+00 : f32
    %28 = vector.broadcast %cst : f32 to vector<128x128xf32>
    %29 = arith.maximumf %27, %28 : vector<128x128xf32>
    %30 = arith.truncf %29 : vector<128x128xf32> to vector<128x128xbf16>
    %c0_5 = arith.constant 0 : index
    %c0_6 = arith.constant 0 : index
    %31 = vector.load %arg4[%c0_5, %c0_6] : memref<128x128xbf16, #tpu.memory_space<vmem>>, vector<128x128xbf16>
    %cst_7 = arith.constant dense<0.000000e+00> : vector<128x128xf32>
    %32 = tpu.matmul %30, %31, %cst_7 {dimension_numbers = #tpu.dot_dimension_numbers<[1], [0], [0], [1], [0, 0, 1, 1], [], []>} : vector<128x128xbf16>, vector<128x128xbf16>, vector<128x128xf32> -> vector<128x128xf32>
    %c0_8 = arith.constant 0 : index
    %c0_9 = arith.constant 0 : index
    %33 = vector.load %arg5[%c0_8, %c0_9] : memref<1x128xf32, #tpu.memory_space<vmem>>, vector<1x128xf32>
    %34 = vector.broadcast %33 : vector<1x128xf32> to vector<128x128xf32>
    %35 = arith.addf %32, %34 : vector<128x128xf32>
    %cst_10 = arith.constant 0.000000e+00 : f32
    %36 = vector.broadcast %cst_10 : f32 to vector<128x128xf32>
    %37 = arith.maximumf %35, %36 : vector<128x128xf32>
    %c0_11 = arith.constant 0 : index
    %c0_12 = arith.constant 0 : index
    %38 = vector.load %arg6[%c0_11, %c0_12] : memref<8x128xbf16, #tpu.memory_space<vmem>>, vector<8x128xbf16>
    %39 = arith.truncf %37 : vector<128x128xf32> to vector<128x128xbf16>
    %cst_13 = arith.constant dense<0.000000e+00> : vector<8x128xf32>
    %40 = tpu.matmul %38, %39, %cst_13 {dimension_numbers = #tpu.dot_dimension_numbers<[1], [1], [0], [0], [0, 0, 1, 0], [], []>} : vector<8x128xbf16>, vector<128x128xbf16>, vector<8x128xf32> -> vector<8x128xf32>
    %c0_14 = arith.constant 0 : index
    %c0_15 = arith.constant 0 : index
    %41 = vector.load %arg7[%c0_14, %c0_15] : memref<8x1xf32, #tpu.memory_space<vmem>>, vector<8x1xf32>
    %42 = vector.broadcast %41 : vector<8x1xf32> to vector<8x128xf32>
    %43 = arith.addf %40, %42 : vector<8x128xf32>
    %c0_16 = arith.constant 0 : index
    %c0_17 = arith.constant 0 : index
    %44 = vector.load %arg8[%c0_16, %c0_17] : memref<8x128xf32, #tpu.memory_space<vmem>>, vector<8x128xf32>
    tpu.vector_store %arg8[%c0_16, %c0_17], %43 {strides = array<i32>} : memref<8x128xf32, #tpu.memory_space<vmem>>, vector<8x128xf32>,
    return
  }
  func.func @transform_0(%arg0: i32) -> (i32, i32) {
    %c0_i32 = arith.constant 0 : i32
    %c0_i32_0 = arith.constant 0 : i32
    return %arg0, %c0_i32 : i32, i32
  }
  func.func @transform_1(%arg0: i32) -> (i32, i32) {
    %c0_i32 = arith.constant 0 : i32
    %c0_i32_0 = arith.constant 0 : i32
    %c0_i32_1 = arith.constant 0 : i32
    return %c0_i32, %c0_i32_0 : i32, i32
  }
  func.func @transform_2(%arg0: i32) -> (i32, i32) {
    %c0_i32 = arith.constant 0 : i32
    %c0_i32_0 = arith.constant 0 : i32
    %c0_i32_1 = arith.constant 0 : i32
    return %c0_i32, %c0_i32_0 : i32, i32
  }
  func.func @transform_3(%arg0: i32) -> (i32, i32) {
    %c0_i32 = arith.constant 0 : i32
    %c0_i32_0 = arith.constant 0 : i32
    %c0_i32_1 = arith.constant 0 : i32
    return %c0_i32, %c0_i32_0 : i32, i32
  }
  func.func @transform_4(%arg0: i32) -> (i32, i32) {
    %c0_i32 = arith.constant 0 : i32
    %c0_i32_0 = arith.constant 0 : i32
    %c0_i32_1 = arith.constant 0 : i32
    return %c0_i32, %c0_i32_0 : i32, i32
  }
  func.func @transform_5(%arg0: i32) -> (i32, i32) {
    %c0_i32 = arith.constant 0 : i32
    %c0_i32_0 = arith.constant 0 : i32
    %c0_i32_1 = arith.constant 0 : i32
    return %c0_i32, %c0_i32_0 : i32, i32
  }
  func.func @transform_6(%arg0: i32) -> (i32, i32) {
    %c0_i32 = arith.constant 0 : i32
    %c0_i32_0 = arith.constant 0 : i32
    %c0_i32_1 = arith.constant 0 : i32
    return %c0_i32, %c0_i32_0 : i32, i32
  }
  func.func @transform_7(%arg0: i32) -> (i32, i32) {
    %c0_i32 = arith.constant 0 : i32
    %c0_i32_0 = arith.constant 0 : i32
    return %c0_i32, %arg0 : i32, i32
  }
}

</mosaic_0001>

<llo_original>
// kernel: tpu_custom_call.1
$region0: #{tpu_custom_call.1}
  #allocation0 [shape = 'u32[]', space=smem, size = 0x4, offset = 0x4, fixed_abs, tag = 'smem constant byte address 0x4 - core index']
  #allocation1 [shape = 'u32[72,128]{1,0:T(1,128)}', space=vmem, size = 0x9000, scoped, tag = 'internal scratch']
  %s0 = inlined_call_operand.vmem [shape: f32[128,4], index: 0, kind: input, shape index: {}]
  %s1 = inlined_call_operand.vmem [shape: f32[4,128], index: 1, kind: input, shape index: {}]
  %s2 = inlined_call_operand.vmem [shape: f32[1,128], index: 2, kind: input, shape index: {}]
  %s3 = inlined_call_operand.vmem [shape: bf16[128,128], index: 3, kind: input, shape index: {}]
  %s4 = inlined_call_operand.vmem [shape: f32[1,128], index: 4, kind: input, shape index: {}]
  %s5 = inlined_call_operand.vmem [shape: bf16[8,128], index: 5, kind: input, shape index: {}]
  %s6 = inlined_call_operand.vmem [shape: f32[8,1], index: 6, kind: input, shape index: {}]
  %s7 = inlined_call_operand.hbm [shape: f32[8,128], index: 7, kind: output, shape index: {}]
  %s8 = sld [smem:[#allocation0]]
  $region38: #{tpu_custom_call.1} parent=0
    _
  %s10 = ssub.s32 1, %s8
  %s11 = scalar_select 0, %s10, %s8
  $region1: #{tpu_custom_call.1} parent=0
    #allocation2 [shape = 'u8[4096]{0}', space=vmem, size = 0x1000, scoped, tag = 'output window, operand 0, single buffered']
    #allocation3 [shape = 's32[1]{0}', space=sflag, size = 0x4, scoped, tag = 'scoped memory for tpu_custom_call.1']
    %12 = vsyncpa [#allocation3], 0
    // Predicated region
    $region2: #{tpu_custom_call.1} parent=1 // pred_check
      _
    $region3: #{tpu_custom_call.1} parent=1 // pred_check_branch
      %14 = sbr.rel (0) target = $region5
    $region4: #{tpu_custom_call.1} parent=1 // pred_region
      _
    $region5: #{tpu_custom_call.1} parent=1 // pred_fallthru
      _
    // Predicated region
    $region6: #{tpu_custom_call.1} parent=1 // pred_check
      _
    $region7: #{tpu_custom_call.1} parent=1 // pred_check_branch
      %16 = sbr.rel (0) target = $region9
    $region8: #{tpu_custom_call.1} parent=1 // pred_region
      _
    $region9: #{tpu_custom_call.1} parent=1 // pred_fallthru
      _
    // Predicated region
    $region10: #{tpu_custom_call.1} parent=1 // pred_check
      _
    $region11: #{tpu_custom_call.1} parent=1 // pred_check_branch
      %18 = sbr.rel (0) target = $region13
    $region12: #{tpu_custom_call.1} parent=1 // pred_region
      _
    $region13: #{tpu_custom_call.1} parent=1 // pred_fallthru
      _
    // Predicated region
    $region14: #{tpu_custom_call.1} parent=1 // pred_check
      _
    $region15: #{tpu_custom_call.1} parent=1 // pred_check_branch
      %20 = sbr.rel (0) target = $region17
    $region16: #{tpu_custom_call.1} parent=1 // pred_region
      _
    $region17: #{tpu_custom_call.1} parent=1 // pred_fallthru
      _
    // Predicated region
    $region18: #{tpu_custom_call.1} parent=1 // pred_check
      _
    $region19: #{tpu_custom_call.1} parent=1 // pred_check_branch
      %22 = sbr.rel (0) target = $region21
    $region20: #{tpu_custom_call.1} parent=1 // pred_region
      _
    $region21: #{tpu_custom_call.1} parent=1 // pred_fallthru
      _
    // Predicated region
    $region22: #{tpu_custom_call.1} parent=1 // pred_check
      _
    $region23: #{tpu_custom_call.1} parent=1 // pred_check_branch
      %24 = sbr.rel (0) target = $region25
    $region24: #{tpu_custom_call.1} parent=1 // pred_region
      _
    $region25: #{tpu_custom_call.1} parent=1 // pred_fallthru
      _
    // Predicated region
    $region26: #{tpu_custom_call.1} parent=1 // pred_check
      _
    $region27: #{tpu_custom_call.1} parent=1 // pred_check_branch
      %26 = sbr.rel (0) target = $region29
    $region28: #{tpu_custom_call.1} parent=1 // pred_region
      _
    $region29: #{tpu_custom_call.1} parent=1 // pred_fallthru
      _
    %v27 = vld [vmem:[%s0] sm:$0xff]
    %v28 = vld [vmem:[%s0 + $0x8] sm:$0xff]
    %v29 = vld [vmem:[%s0 + $0x10] sm:$0xff]
    %v30 = vld [vmem:[%s0 + $0x18] sm:$0xff]
    %v31 = vld [vmem:[%s0 + $0x20] sm:$0xff]
    %v32 = vld [vmem:[%s0 + $0x28] sm:$0xff]
    %v33 = vld [vmem:[%s0 + $0x30] sm:$0xff]
    %v34 = vld [vmem:[%s0 + $0x38] sm:$0xff]
    %v35 = vld [vmem:[%s0 + $0x40] sm:$0xff]
    %v36 = vld [vmem:[%s0 + $0x48] sm:$0xff]
    %v37 = vld [vmem:[%s0 + $0x50] sm:$0xff]
    %v38 = vld [vmem:[%s0 + $0x58] sm:$0xff]
    %v39 = vld [vmem:[%s0 + $0x60] sm:$0xff]
    %v40 = vld [vmem:[%s0 + $0x68] sm:$0xff]
    %v41 = vld [vmem:[%s0 + $0x70] sm:$0xff]
    %v42 = vld [vmem:[%s0 + $0x78] sm:$0xff]
    %v43 = vld [vmem:[%s1] sm:$0xf]
    %45 = vset.pattern.permute.xlu0 0
    %46 = vperm.xlu0 %45, %v27
    %v47 = vpop.permute.xlu0 %46
    %50 = vset.pattern.permute.xlu0 0
    %51 = vperm.xlu0 %50, %v28
    %v52 = vpop.permute.xlu0 %51
    %55 = vset.pattern.permute.xlu0 0
    %56 = vperm.xlu0 %55, %v29
    %v57 = vpop.permute.xlu0 %56
    %60 = vset.pattern.permute.xlu0 0
    %61 = vperm.xlu0 %60, %v30
    %v62 = vpop.permute.xlu0 %61
    %65 = vset.pattern.permute.xlu0 0
    %66 = vperm.xlu0 %65, %v31
    %v67 = vpop.permute.xlu0 %66
    %70 = vset.pattern.permute.xlu0 0
    %71 = vperm.xlu0 %70, %v32
    %v72 = vpop.permute.xlu0 %71
    %75 = vset.pattern.permute.xlu0 0
    %76 = vperm.xlu0 %75, %v33
    %v77 = vpop.permute.xlu0 %76
    %80 = vset.pattern.permute.xlu0 0
    %81 = vperm.xlu0 %80, %v34
    %v82 = vpop.permute.xlu0 %81
    %85 = vset.pattern.permute.xlu0 0
    %86 = vperm.xlu0 %85, %v35
    %v87 = vpop.permute.xlu0 %86
    %90 = vset.pattern.permute.xlu0 0
    %91 = vperm.xlu0 %90, %v36
    %v92 = vpop.permute.xlu0 %91
    %95 = vset.pattern.permute.xlu0 0
    %96 = vperm.xlu0 %95, %v37
    %v97 = vpop.permute.xlu0 %96
    %100 = vset.pattern.permute.xlu0 0
    %101 = vperm.xlu0 %100, %v38
    %v102 = vpop.permute.xlu0 %101
    %105 = vset.pattern.permute.xlu0 0
    %106 = vperm.xlu0 %105, %v39
    %v107 = vpop.permute.xlu0 %106
    %110 = vset.pattern.permute.xlu0 0
    %111 = vperm.xlu0 %110, %v40
    %v112 = vpop.permute.xlu0 %111
    %115 = vset.pattern.permute.xlu0 0
    %116 = vperm.xlu0 %115, %v41
    %v117 = vpop.permute.xlu0 %116
    %120 = vset.pattern.permute.xlu0 0
    %121 = vperm.xlu0 %120, %v42
    %v122 = vpop.permute.xlu0 %121
    %v124 = vperm.slane %v43, 0
    %v125 = vmul.f32 %v47, %v124
    %v126 = vmul.f32 %v52, %v124
    %v127 = vmul.f32 %v57, %v124
    %v128 = vmul.f32 %v62, %v124
    %v129 = vmul.f32 %v67, %v124
    %v130 = vmul.f32 %v72, %v124
    %v131 = vmul.f32 %v77, %v124
    %v132 = vmul.f32 %v82, %v124
    %v133 = vmul.f32 %v87, %v124
    %v134 = vmul.f32 %v92, %v124
    %v135 = vmul.f32 %v97, %v124
    %v136 = vmul.f32 %v102, %v124
    %v137 = vmul.f32 %v107, %v124
    %v138 = vmul.f32 %v112, %v124
    %v139 = vmul.f32 %v117, %v124
    %v140 = vmul.f32 %v122, %v124
    %141 = vset.pattern.permute.xlu0 1
    %142 = vperm.xlu0 %141, %v27
    %v143 = vpop.permute.xlu0 %142
    %145 = vset.pattern.permute.xlu0 1
    %146 = vperm.xlu0 %145, %v28
    %v147 = vpop.permute.xlu0 %146
    %149 = vset.pattern.permute.xlu0 1
    %150 = vperm.xlu0 %149, %v29
    %v151 = vpop.permute.xlu0 %150
    %153 = vset.pattern.permute.xlu0 1
    %154 = vperm.xlu0 %153, %v30
    %v155 = vpop.permute.xlu0 %154
    %157 = vset.pattern.permute.xlu0 1
    %158 = vperm.xlu0 %157, %v31
    %v159 = vpop.permute.xlu0 %158
    %161 = vset.pattern.permute.xlu0 1
    %162 = vperm.xlu0 %161, %v32
    %v163 = vpop.permute.xlu0 %162
    %165 = vset.pattern.permute.xlu0 1
    %166 = vperm.xlu0 %165, %v33
    %v167 = vpop.permute.xlu0 %166
    %169 = vset.pattern.permute.xlu0 1
    %170 = vperm.xlu0 %169, %v34
    %v171 = vpop.permute.xlu0 %170
    %173 = vset.pattern.permute.xlu0 1
    %174 = vperm.xlu0 %173, %v35
    %v175 = vpop.permute.xlu0 %174
    %177 = vset.pattern.permute.xlu0 1
    %178 = vperm.xlu0 %177, %v36
    %v179 = vpop.permute.xlu0 %178
    %181 = vset.pattern.permute.xlu0 1
    %182 = vperm.xlu0 %181, %v37
    %v183 = vpop.permute.xlu0 %182
    %185 = vset.pattern.permute.xlu0 1
    %186 = vperm.xlu0 %185, %v38
    %v187 = vpop.permute.xlu0 %186
    %189 = vset.pattern.permute.xlu0 1
    %190 = vperm.xlu0 %189, %v39
    %v191 = vpop.permute.xlu0 %190
    %193 = vset.pattern.permute.xlu0 1
    %194 = vperm.xlu0 %193, %v40
    %v195 = vpop.permute.xlu0 %194
    %197 = vset.pattern.permute.xlu0 1
    %198 = vperm.xlu0 %197, %v41
    %v199 = vpop.permute.xlu0 %198
    %201 = vset.pattern.permute.xlu0 1
    %202 = vperm.xlu0 %201, %v42
    %v203 = vpop.permute.xlu0 %202
    %v205 = vperm.slane %v43, 1
    %v206 = vmul.f32 %v143, %v205
    %v207 = vmul.f32 %v147, %v205
    %v208 = vmul.f32 %v151, %v205
    %v209 = vmul.f32 %v155, %v205
    %v210 = vmul.f32 %v159, %v205
    %v211 = vmul.f32 %v163, %v205
    %v212 = vmul.f32 %v167, %v205
    %v213 = vmul.f32 %v171, %v205
    %v214 = vmul.f32 %v175, %v205
    %v215 = vmul.f32 %v179, %v205
    %v216 = vmul.f32 %v183, %v205
    %v217 = vmul.f32 %v187, %v205
    %v218 = vmul.f32 %v191, %v205
    %v219 = vmul.f32 %v195, %v205
    %v220 = vmul.f32 %v199, %v205
    %v221 = vmul.f32 %v203, %v205
    %v222 = vadd.f32 %v125, %v206
    %v223 = vadd.f32 %v126, %v207
    %v224 = vadd.f32 %v127, %v208
    %v225 = vadd.f32 %v128, %v209
    %v226 = vadd.f32 %v129, %v210
    %v227 = vadd.f32 %v130, %v211
    %v228 = vadd.f32 %v131, %v212
    %v229 = vadd.f32 %v132, %v213
    %v230 = vadd.f32 %v133, %v214
    %v231 = vadd.f32 %v134, %v215
    %v232 = vadd.f32 %v135, %v216
    %v233 = vadd.f32 %v136, %v217
    %v234 = vadd.f32 %v137, %v218
    %v235 = vadd.f32 %v138, %v219
    %v236 = vadd.f32 %v139, %v220
    %v237 = vadd.f32 %v140, %v221
    %238 = vset.pattern.permute.xlu0 2
    %239 = vperm.xlu0 %238, %v27
    %v240 = vpop.permute.xlu0 %239
    %242 = vset.pattern.permute.xlu0 2
    %243 = vperm.xlu0 %242, %v28
    %v244 = vpop.permute.xlu0 %243
    %246 = vset.pattern.permute.xlu0 2
    %247 = vperm.xlu0 %246, %v29
    %v248 = vpop.permute.xlu0 %247
    %250 = vset.pattern.permute.xlu0 2
    %251 = vperm.xlu0 %250, %v30
    %v252 = vpop.permute.xlu0 %251
    %254 = vset.pattern.permute.xlu0 2
    %255 = vperm.xlu0 %254, %v31
    %v256 = vpop.permute.xlu0 %255
    %258 = vset.pattern.permute.xlu0 2
    %259 = vperm.xlu0 %258, %v32
    %v260 = vpop.permute.xlu0 %259
    %262 = vset.pattern.permute.xlu0 2
    %263 = vperm.xlu0 %262, %v33
    %v264 = vpop.permute.xlu0 %263
    %266 = vset.pattern.permute.xlu0 2
    %267 = vperm.xlu0 %266, %v34
    %v268 = vpop.permute.xlu0 %267
    %270 = vset.pattern.permute.xlu0 2
    %271 = vperm.xlu0 %270, %v35
    %v272 = vpop.permute.xlu0 %271
    %274 = vset.pattern.permute.xlu0 2
    %275 = vperm.xlu0 %274, %v36
    %v276 = vpop.permute.xlu0 %275
    %278 = vset.pattern.permute.xlu0 2
    %279 = vperm.xlu0 %278, %v37
    %v280 = vpop.permute.xlu0 %279
    %282 = vset.pattern.permute.xlu0 2
    %283 = vperm.xlu0 %282, %v38
    %v284 = vpop.permute.xlu0 %283
    %286 = vset.pattern.permute.xlu0 2
    %287 = vperm.xlu0 %286, %v39
    %v288 = vpop.permute.xlu0 %287
    %290 = vset.pattern.permute.xlu0 2
    %291 = vperm.xlu0 %290, %v40
    %v292 = vpop.permute.xlu0 %291
    %294 = vset.pattern.permute.xlu0 2
    %295 = vperm.xlu0 %294, %v41
    %v296 = vpop.permute.xlu0 %295
    %298 = vset.pattern.permute.xlu0 2
    %299 = vperm.xlu0 %298, %v42
    %v300 = vpop.permute.xlu0 %299
    %v302 = vperm.slane %v43, 2
    %v303 = vmul.f32 %v240, %v302
    %v304 = vmul.f32 %v244, %v302
    %v305 = vmul.f32 %v248, %v302
    %v306 = vmul.f32 %v252, %v302
    %v307 = vmul.f32 %v256, %v302
    %v308 = vmul.f32 %v260, %v302
    %v309 = vmul.f32 %v264, %v302
    %v310 = vmul.f32 %v268, %v302
    %v311 = vmul.f32 %v272, %v302
    %v312 = vmul.f32 %v276, %v302
    %v313 = vmul.f32 %v280, %v302
    %v314 = vmul.f32 %v284, %v302
    %v315 = vmul.f32 %v288, %v302
    %v316 = vmul.f32 %v292, %v302
    %v317 = vmul.f32 %v296, %v302
    %v318 = vmul.f32 %v300, %v302
    %319 = vset.pattern.permute.xlu0 3
    %320 = vperm.xlu0 %319, %v27
    %v321 = vpop.permute.xlu0 %320
    %323 = vset.pattern.permute.xlu0 3
    %324 = vperm.xlu0 %323, %v28
    %v325 = vpop.permute.xlu0 %324
    %327 = vset.pattern.permute.xlu0 3
    %328 = vperm.xlu0 %327, %v29
    %v329 = vpop.permute.xlu0 %328
    %331 = vset.pattern.permute.xlu0 3
    %332 = vperm.xlu0 %331, %v30
    %v333 = vpop.permute.xlu0 %332
    %335 = vset.pattern.permute.xlu0 3
    %336 = vperm.xlu0 %335, %v31
    %v337 = vpop.permute.xlu0 %336
    %339 = vset.pattern.permute.xlu0 3
    %340 = vperm.xlu0 %339, %v32
    %v341 = vpop.permute.xlu0 %340
    %343 = vset.pattern.permute.xlu0 3
    %344 = vperm.xlu0 %343, %v33
    %v345 = vpop.permute.xlu0 %344
    %347 = vset.pattern.permute.xlu0 3
    %348 = vperm.xlu0 %347, %v34
    %v349 = vpop.permute.xlu0 %348
    %351 = vset.pattern.permute.xlu0 3
    %352 = vperm.xlu0 %351, %v35
    %v353 = vpop.permute.xlu0 %352
    %355 = vset.pattern.permute.xlu0 3
    %356 = vperm.xlu0 %355, %v36
    %v357 = vpop.permute.xlu0 %356
    %359 = vset.pattern.permute.xlu0 3
    %360 = vperm.xlu0 %359, %v37
    %v361 = vpop.permute.xlu0 %360
    %363 = vset.pattern.permute.xlu0 3
    %364 = vperm.xlu0 %363, %v38
    %v365 = vpop.permute.xlu0 %364
    %367 = vset.pattern.permute.xlu0 3
    %368 = vperm.xlu0 %367, %v39
    %v369 = vpop.permute.xlu0 %368
    %371 = vset.pattern.permute.xlu0 3
    %372 = vperm.xlu0 %371, %v40
    %v373 = vpop.permute.xlu0 %372
    %375 = vset.pattern.permute.xlu0 3
    %376 = vperm.xlu0 %375, %v41
    %v377 = vpop.permute.xlu0 %376
    %379 = vset.pattern.permute.xlu0 3
    %380 = vperm.xlu0 %379, %v42
    %v381 = vpop.permute.xlu0 %380
    %v383 = vperm.slane %v43, 3
    %v384 = vmul.f32 %v321, %v383
    %v385 = vmul.f32 %v325, %v383
    %v386 = vmul.f32 %v329, %v383
    %v387 = vmul.f32 %v333, %v383
    %v388 = vmul.f32 %v337, %v383
    %v389 = vmul.f32 %v341, %v383
    %v390 = vmul.f32 %v345, %v383
    %v391 = vmul.f32 %v349, %v383
    %v392 = vmul.f32 %v353, %v383
    %v393 = vmul.f32 %v357, %v383
    %v394 = vmul.f32 %v361, %v383
    %v395 = vmul.f32 %v365, %v383
    %v396 = vmul.f32 %v369, %v383
    %v397 = vmul.f32 %v373, %v383
    %v398 = vmul.f32 %v377, %v383
    %v399 = vmul.f32 %v381, %v383
    %v400 = vadd.f32 %v303, %v384
    %v401 = vadd.f32 %v304, %v385
    %v402 = vadd.f32 %v305, %v386
    %v403 = vadd.f32 %v306, %v387
    %v404 = vadd.f32 %v307, %v388
    %v405 = vadd.f32 %v308, %v389
    %v406 = vadd.f32 %v309, %v390
    %v407 = vadd.f32 %v310, %v391
    %v408 = vadd.f32 %v311, %v392
    %v409 = vadd.f32 %v312, %v393
    %v410 = vadd.f32 %v313, %v394
    %v411 = vadd.f32 %v314, %v395
    %v412 = vadd.f32 %v315, %v396
    %v413 = vadd.f32 %v316, %v397
    %v414 = vadd.f32 %v317, %v398
    %v415 = vadd.f32 %v318, %v399
    %v416 = vld [vmem:[%s2] sm:$0x1]
    %v418 = vperm.slane %v416, 0
    %v420 = vadd.f32 %v418, %v222
    %v421 = vadd.f32 %v418, %v223
    %v422 = vadd.f32 %v418, %v224
    %v423 = vadd.f32 %v418, %v225
    %v424 = vadd.f32 %v418, %v226
    %v425 = vadd.f32 %v418, %v227
    %v426 = vadd.f32 %v418, %v228
    %v427 = vadd.f32 %v418, %v229
    %v428 = vadd.f32 %v418, %v230
    %v429 = vadd.f32 %v418, %v231
    %v430 = vadd.f32 %v418, %v232
    %v431 = vadd.f32 %v418, %v233
    %v432 = vadd.f32 %v418, %v234
    %v433 = vadd.f32 %v418, %v235
    %v434 = vadd.f32 %v418, %v236
    %v435 = vadd.f32 %v418, %v237
    %v436 = vadd.f32 %v420, %v400
    %v437 = vadd.f32 %v421, %v401
    %v438 = vadd.f32 %v422, %v402
    %v439 = vadd.f32 %v423, %v403
    %v440 = vadd.f32 %v424, %v404
    %v441 = vadd.f32 %v425, %v405
    %v442 = vadd.f32 %v426, %v406
    %v443 = vadd.f32 %v427, %v407
    %v444 = vadd.f32 %v428, %v408
    %v445 = vadd.f32 %v429, %v409
    %v446 = vadd.f32 %v430, %v410
    %v447 = vadd.f32 %v431, %v411
    %v448 = vadd.f32 %v432, %v412
    %v449 = vadd.f32 %v433, %v413
    %v450 = vadd.f32 %v434, %v414
    %v451 = vadd.f32 %v435, %v415
    %v452 = vmax.f32 %v436, 0.0
    %v453 = vmax.f32 %v437, 0.0
    %v454 = vmax.f32 %v438, 0.0
    %v455 = vmax.f32 %v439, 0.0
    %v456 = vmax.f32 %v440, 0.0
    %v457 = vmax.f32 %v441, 0.0
    %v458 = vmax.f32 %v442, 0.0
    %v459 = vmax.f32 %v443, 0.0
    %v460 = vmax.f32 %v444, 0.0
    %v461 = vmax.f32 %v445, 0.0
    %v462 = vmax.f32 %v446, 0.0
    %v463 = vmax.f32 %v447, 0.0
    %v464 = vmax.f32 %v448, 0.0
    %v465 = vmax.f32 %v449, 0.0
    %v466 = vmax.f32 %v450, 0.0
    %v467 = vmax.f32 %v451, 0.0
    %v468 = vpack.c.bf16 %v453, %v452
    %v469 = vpack.c.bf16 %v455, %v454
    %v470 = vpack.c.bf16 %v457, %v456
    %v471 = vpack.c.bf16 %v459, %v458
    %v472 = vpack.c.bf16 %v461, %v460
    %v473 = vpack.c.bf16 %v463, %v462
    %v474 = vpack.c.bf16 %v465, %v464
    %v475 = vpack.c.bf16 %v467, %v466
    %v476 = vld [vmem:[%s3] sm:$0xf]
    %v477 = vld [vmem:[%s3 + $0x4] sm:$0xf]
    %v478 = vld [vmem:[%s3 + $0x8] sm:$0xf]
    %v479 = vld [vmem:[%s3 + $0xc] sm:$0xf]
    %v480 = vld [vmem:[%s3 + $0x10] sm:$0xf]
    %v481 = vld [vmem:[%s3 + $0x14] sm:$0xf]
    %v482 = vld [vmem:[%s3 + $0x18] sm:$0xf]
    %v483 = vld [vmem:[%s3 + $0x1c] sm:$0xf]
    %v484 = vld [vmem:[%s3 + $0x20] sm:$0xf]
    %v485 = vld [vmem:[%s3 + $0x24] sm:$0xf]
    %v486 = vld [vmem:[%s3 + $0x28] sm:$0xf]
    %v487 = vld [vmem:[%s3 + $0x2c] sm:$0xf]
    %v488 = vld [vmem:[%s3 + $0x30] sm:$0xf]
    %v489 = vld [vmem:[%s3 + $0x34] sm:$0xf]
    %v490 = vld [vmem:[%s3 + $0x38] sm:$0xf]
    %v491 = vld [vmem:[%s3 + $0x3c] sm:$0xf]
    %v492 = vld [vmem:[%s4] sm:$0x1]
    %v494 = vperm.slane %v492, 0
    %v512 = vunpack.c.l.b16 %v476
    %v513 = vunpack.c.l.b16 %v477
    %v514 = vunpack.c.l.b16 %v478
    %v515 = vunpack.c.l.b16 %v479
    %v516 = vunpack.c.l.b16 %v480
    %v517 = vunpack.c.l.b16 %v481
    %v518 = vunpack.c.l.b16 %v482
    %v519 = vunpack.c.l.b16 %v483
    %v520 = vunpack.c.l.b16 %v484
    %v521 = vunpack.c.l.b16 %v485
    %v522 = vunpack.c.l.b16 %v486
    %v523 = vunpack.c.l.b16 %v487
    %v524 = vunpack.c.l.b16 %v488
    %v525 = vunpack.c.l.b16 %v489
    %v526 = vunpack.c.l.b16 %v490
    %v527 = vunpack.c.l.b16 %v491
    %v528 = vpack.c.b16 %v513, %v512
    %v529 = vpack.c.b16 %v515, %v514
    %v530 = vpack.c.b16 %v517, %v516
    %v531 = vpack.c.b16 %v519, %v518
    %v532 = vpack.c.b16 %v521, %v520
    %v533 = vpack.c.b16 %v523, %v522
    %v534 = vpack.c.b16 %v525, %v524
    %v535 = vpack.c.b16 %v527, %v526
    %544 = vmatpush.bf16.msra.mxu0 %v535
    %545 = vmatpush.bf16.msra.mxu0 %v534
    %546 = vmatpush.bf16.msra.mxu0 %v533
    %547 = vmatpush.bf16.msra.mxu0 %v532
    %548 = vmatpush.bf16.msra.mxu0 %v531
    %549 = vmatpush.bf16.msra.mxu0 %v530
    %550 = vmatpush.bf16.msra.mxu0 %v529
    %551 = vmatpush.bf16.msra.mxu0 %v528
    %552 = vmatmul.bf16.gmra.mxu0 %v468
    %v553 = vpop.f32.mrf.mxu0
    %v554 = vadd.f32 %v494, %v553
    %v555 = vpop.f32.mrf.mxu0
    %v556 = vadd.f32 %v494, %v555
    %557 = vmatmul.bf16.gmra.mxu0 %v469
    %v558 = vpop.f32.mrf.mxu0
    %v559 = vadd.f32 %v494, %v558
    %v560 = vpop.f32.mrf.mxu0
    %v561 = vadd.f32 %v494, %v560
    %562 = vmatmul.bf16.gmra.mxu0 %v470
    %v563 = vpop.f32.mrf.mxu0
    %v564 = vadd.f32 %v494, %v563
    %v565 = vpop.f32.mrf.mxu0
    %v566 = vadd.f32 %v494, %v565
    %567 = vmatmul.bf16.gmra.mxu0 %v471
    %v568 = vpop.f32.mrf.mxu0
    %v569 = vadd.f32 %v494, %v568
    %v570 = vpop.f32.mrf.mxu0
    %v571 = vadd.f32 %v494, %v570
    %572 = vmatmul.bf16.gmra.mxu0 %v472
    %v573 = vpop.f32.mrf.mxu0
    %v574 = vadd.f32 %v494, %v573
    %v575 = vpop.f32.mrf.mxu0
    %v576 = vadd.f32 %v494, %v575
    %577 = vmatmul.bf16.gmra.mxu0 %v473
    %v578 = vpop.f32.mrf.mxu0
    %v579 = vadd.f32 %v494, %v578
    %v580 = vpop.f32.mrf.mxu0
    %v581 = vadd.f32 %v494, %v580
    %582 = vmatmul.bf16.gmra.mxu0 %v474
    %v583 = vpop.f32.mrf.mxu0
    %v584 = vadd.f32 %v494, %v583
    %v585 = vpop.f32.mrf.mxu0
    %v586 = vadd.f32 %v494, %v585
    %587 = vmatmul.bf16.gmra.mxu0 %v475
    %v588 = vpop.f32.mrf.mxu0
    %v589 = vadd.f32 %v494, %v588
    %v590 = vpop.f32.mrf.mxu0
    %v591 = vadd.f32 %v494, %v590
    %592 = vdwg.mxu0
    %v593 = vmax.f32 %v554, 0.0
    %v594 = vmax.f32 %v556, 0.0
    %v595 = vmax.f32 %v559, 0.0
    %v596 = vmax.f32 %v561, 0.0
    %v597 = vmax.f32 %v564, 0.0
    %v598 = vmax.f32 %v566, 0.0
    %v599 = vmax.f32 %v569, 0.0
    %v600 = vmax.f32 %v571, 0.0
    %v601 = vmax.f32 %v574, 0.0
    %v602 = vmax.f32 %v576, 0.0
    %v603 = vmax.f32 %v579, 0.0
    %v604 = vmax.f32 %v581, 0.0
    %v605 = vmax.f32 %v584, 0.0
    %v606 = vmax.f32 %v586, 0.0
    %v607 = vmax.f32 %v589, 0.0
    %v608 = vmax.f32 %v591, 0.0
    %v609 = vld [vmem:[%s5] sm:$0xf]
    %v610 = vpack.c.bf16 %v594, %v593
    %v611 = vpack.c.bf16 %v596, %v595
    %v612 = vpack.c.bf16 %v598, %v597
    %v613 = vpack.c.bf16 %v600, %v599
    %v614 = vpack.c.bf16 %v602, %v601
    %v615 = vpack.c.bf16 %v604, %v603
    %v616 = vpack.c.bf16 %v606, %v605
    %v617 = vpack.c.bf16 %v608, %v607
    %v618 = vld [vmem:[%s6] sm:$0xff]
    %620 = vset.pattern.permute.xlu0 0
    %621 = vperm.xlu0 %620, %v618
    %v622 = vpop.permute.xlu0 %621
    %624 = vmatpush.bf16.xpose.msra.mxu0 %v617
    %625 = vmatpush.bf16.xpose.msra.mxu0 %v616
    %626 = vmatpush.bf16.xpose.msra.mxu0 %v615
    %627 = vmatpush.bf16.xpose.msra.mxu0 %v614
    %628 = vmatpush.bf16.xpose.msra.mxu0 %v613
    %629 = vmatpush.bf16.xpose.msra.mxu0 %v612
    %630 = vmatpush.bf16.xpose.msra.mxu0 %v611
    %631 = vmatpush.bf16.xpose.msra.mxu0 %v610
    %632 = vmatmul.bf16.gmra.mxu0 %v609
    %v633 = vpop.f32.mrf.mxu0
    %v634 = vadd.f32 %v622, %v633
    %v635 = vpop.f32.mrf.mxu0
    %636 = vdwg.mxu0
    %637 = vst [vmem:[#allocation2] sm:$0xff] %v634
    // Predicated region
    $region30: #{tpu_custom_call.1} parent=1 // pred_check
      _
    $region31: #{tpu_custom_call.1} parent=1 // pred_check_branch
      %639 = sbr.rel (0) target = $region33
    $region32: #{tpu_custom_call.1} parent=1 // pred_region
      %641 = vsyncadd [#allocation3], 0
      %s643 = sshll.u32 [#allocation2], 4
      %s644 = int_to_ptr.vmem [resolvable:$true] %s643
      %s645 = sshll.u32 %s7, 4
      %s646 = int_to_ptr.hbm [resolvable:$true] %s645
      %648 = dma.vmem_to_hbm [thread:$0]  %s644, 128, %s646, [#allocation3]
    $region33: #{tpu_custom_call.1} parent=1 // pred_fallthru
      _
    // Predicated region
    $region34: #{tpu_custom_call.1} parent=1 // pred_check
      _
    $region35: #{tpu_custom_call.1} parent=1 // pred_check_branch
      %650 = sbr.rel (0) target = $region37
    $region36: #{tpu_custom_call.1} parent=1 // pred_region
      %652 = dma.done [#allocation3], 128
    $region37: #{tpu_custom_call.1} parent=1 // pred_fallthru
      _
    %653 = vsyncpa [#allocation3], 1

</llo_original>
